<compile_context>
chip_gen: v6e
topology: v6e:2x2x1
jax: 0.10.0
libtpu: 0.0.40
codegen_flags: <defaults>
</compile_context>

<pallas_src>
import functools

import jax
import jax.numpy as jnp
from jax.experimental import pallas as pl
from jax.experimental.pallas import tpu as pltpu


_MAX_TILE_B = 2048  # multiple of 128; keeps the per-step working set well
                    # under a 16 MiB scoped-VMEM budget (safe on v7x too).


def _forward_block(x_ref, w1_ref, b1_ref, w2_ref, b2_ref, w3_ref, b3_ref):
    """Fused MLP on one batch tile. Returns (logits (1, TB) f32, t = exp(-|z|))."""
    # bf16 cast happens here (not in the wrapper): x is read from HBM once as f32.
    x = x_ref[...].astype(jnp.bfloat16)                                  # (TB, IN)
    h1 = jnp.dot(x, w1_ref[...],
                 preferred_element_type=jnp.float32) + b1_ref[...]       # (TB, H) f32
    h1 = jnp.maximum(h1, 0.0)
    h2 = jnp.dot(h1.astype(jnp.bfloat16), w2_ref[...],
                 preferred_element_type=jnp.float32) + b2_ref[...]       # (TB, H) f32
    h2 = jnp.maximum(h2, 0.0)
    # Final N=1 projection: contract h2's H axis directly (no h2.T materialization),
    # result is lane-dense (1, TB).
    logits = jax.lax.dot_general(
        w3_ref[...], h2, dimension_numbers=(((1,), (1,)), ((), ())),
        preferred_element_type=jnp.float32) + b3_ref[...]                # (1, TB)
    t = jnp.exp(-jnp.abs(logits))   # shared between sigmoid and softplus
    return logits, t


def _sigmoid_from_t(logits, t):
    inv = pl.reciprocal(1.0 + t, approx=True)          # EUP approx reciprocal
    return jnp.where(logits >= 0, inv, t * inv)


def _mlp_infer_kernel(x_ref, w1_ref, b1_ref, w2_ref, b2_ref, w3_ref, b3_ref,
                      probs_ref):
    logits, t = _forward_block(x_ref, w1_ref, b1_ref, w2_ref, b2_ref, w3_ref, b3_ref)
    probs_ref[...] = _sigmoid_from_t(logits, t).astype(probs_ref.dtype)


def _mlp_bce_kernel(x_ref, w1_ref, b1_ref, w2_ref, b2_ref, w3_ref, b3_ref, y_ref,
                    probs_ref, loss_ref, *, tile_b, n_inner, batch_valid):
    p = pl.program_id(0)   # parallel (core) axis
    i = pl.program_id(1)   # arbitrary (batch-tile) axis

    # Per-core loss partial, resident across the arbitrary axis.
    @pl.when(i == 0)
    def _init():
        loss_ref[...] = jnp.zeros_like(loss_ref)

    logits, t = _forward_block(x_ref, w1_ref, b1_ref, w2_ref, b2_ref, w3_ref, b3_ref)
    probs_ref[...] = _sigmoid_from_t(logits, t).astype(probs_ref.dtype)

    # BCE-with-logits (stable softplus form): softplus(z) - y*z.
    # log(1+t) ~= log1p(t) to f32 eps here; avoids relying on a log1p lowering.
    softplus = jnp.maximum(logits, 0.0) + jnp.log(1.0 + t)
    loss_elems = softplus - y_ref[...] * logits                          # (1, TB)

    # Mask columns that are batch padding (ragged B support).
    col0 = (p * n_inner + i) * tile_b
    col = col0 + jax.lax.broadcasted_iota(jnp.int32, loss_elems.shape, 1)
    loss_elems = jnp.where(col < batch_valid, loss_elems, 0.0)

    # Scalar tile-sum broadcast into the lane-dense (1, 128) per-core partial.
    loss_ref[...] += jnp.sum(loss_elems)


def _choose_tiling(B):
    """Returns (B_pad, tile_b, n_par, n_inner); tiles are lane-dense (mult of 128)
    whenever there is more than one tile."""
    if B <= _MAX_TILE_B:
        if B >= 512 and B % 256 == 0:
            return B, B // 2, 2, 1        # split across both TCs (v7x)
        return B, B, 1, 1                 # single full-array tile
    tile_b = _MAX_TILE_B
    nb = pl.cdiv(B, tile_b)
    b_pad = nb * tile_b
    n_par = 2 if nb % 2 == 0 else 1
    return b_pad, tile_b, n_par, nb // n_par


def logreg_forward(x, params, label=None):
    """Mirrors LogRegModel.forward (criterion='bce').

    x: [B, input_size] float32; label: [B] float32 or None.
    Returns (probs [B], loss scalar or None).
    (torch .squeeze() would give a 0-d tensor for B==1; here probs stays [B].)
    """
    w1, b1, w2, b2, w3, b3 = params
    B, IN = x.shape
    H = w1.shape[1]

    b_pad, tile_b, n_par, n_inner = _choose_tiling(B)

    # One-time bf16 weight cast normally happens in prepare_params; only cast
    # here if the caller passed f32 weights.
    w1_bf = w1 if w1.dtype == jnp.bfloat16 else w1.astype(jnp.bfloat16)
    w2_bf = w2 if w2.dtype == jnp.bfloat16 else w2.astype(jnp.bfloat16)

    if b_pad != B:
        x = jnp.pad(x, ((0, b_pad - B), (0, 0)))

    grid = (n_par, n_inner)
    x_spec = pl.BlockSpec((tile_b, IN), lambda p, i: (p * n_inner + i, 0))
    row_spec = pl.BlockSpec((1, tile_b), lambda p, i: (0, p * n_inner + i))
    w1_spec = pl.BlockSpec((IN, H), lambda p, i: (0, 0))
    b1_spec = pl.BlockSpec((1, H), lambda p, i: (0, 0))
    w2_spec = pl.BlockSpec((H, H), lambda p, i: (0, 0))
    b2_spec = pl.BlockSpec((1, H), lambda p, i: (0, 0))
    w3_spec = pl.BlockSpec((1, H), lambda p, i: (0, 0))
    b3_spec = pl.BlockSpec((1, 1), lambda p, i: (0, 0))

    flops = 2 * b_pad * (IN * H + H * H + H)
    transcendentals = 3 * b_pad
    bytes_accessed = (x.size * 4 + (w1_bf.size + w2_bf.size) * 2
                      + (b1.size + b2.size + w3.size + b3.size) * 4
                      + b_pad * 4 * (2 if label is not None else 1)
                      + n_par * 128 * 4)

    compiler_params = pltpu.CompilerParams(
        dimension_semantics=("parallel", "arbitrary"),
        vmem_limit_bytes=16 * 1024 * 1024,
    )
    cost = pl.CostEstimate(flops=flops, transcendentals=transcendentals,
                           bytes_accessed=bytes_accessed)

    if label is None:
        probs_row = pl.pallas_call(
            _mlp_infer_kernel,
            out_shape=jax.ShapeDtypeStruct((1, b_pad), jnp.float32),
            grid=grid,
            in_specs=[x_spec, w1_spec, b1_spec, w2_spec, b2_spec, w3_spec, b3_spec],
            out_specs=row_spec,
            compiler_params=compiler_params,
            cost_estimate=cost,
        )(x, w1_bf, b1, w2_bf, b2, w3, b3)
        return probs_row[0, :B], None

    y_row = label.reshape(1, B).astype(jnp.float32)
    if b_pad != B:
        y_row = jnp.pad(y_row, ((0, 0), (0, b_pad - B)))

    kernel = functools.partial(_mlp_bce_kernel, tile_b=tile_b, n_inner=n_inner,
                               batch_valid=B)
    probs_row, loss_row = pl.pallas_call(
        kernel,
        out_shape=(jax.ShapeDtypeStruct((1, b_pad), jnp.float32),        # probs
                   jax.ShapeDtypeStruct((1, n_par * 128), jnp.float32)), # loss partials
        grid=grid,
        in_specs=[x_spec, w1_spec, b1_spec, w2_spec, b2_spec, w3_spec, b3_spec,
                  row_spec],
        out_specs=(row_spec,
                   pl.BlockSpec((1, 128), lambda p, i: (0, p))),
        compiler_params=compiler_params,
        cost_estimate=cost,
    )(x, w1_bf, b1, w2_bf, b2, w3, b3, y_row)

    probs = probs_row[0, :B]
    # Per-core partials (each block holds its sum broadcast across 128 lanes).
    loss = loss_row.reshape(n_par, 128)[:, 0].sum() / B
    return probs, loss


def prepare_params(params):
    """One-time cast of the matmul weights to bf16 (kernel layout)."""
    w1, b1, w2, b2, w3, b3 = params
    return (w1.astype(jnp.bfloat16), b1, w2.astype(jnp.bfloat16), b2, w3, b3)


def init_params(key, input_size=38, hidden_size=64):
    """PyTorch-style uniform(+/- 1/sqrt(fan_in)) init.

    W1, W2 stored [in, out]; W3 stored (1, hidden); biases (1, out) / (1, 1).
    """
    ks = jax.random.split(key, 6)

    def linear(kw, kb, fan_in, w_shape, b_shape):
        bound = 1.0 / jnp.sqrt(jnp.asarray(fan_in, jnp.float32))
        w = jax.random.uniform(kw, w_shape, jnp.float32, -bound, bound)
        b = jax.random.uniform(kb, b_shape, jnp.float32, -bound, bound)
        return w, b

    w1, b1 = linear(ks[0], ks[1], input_size, (input_size, hidden_size), (1, hidden_size))
    w2, b2 = linear(ks[2], ks[3], hidden_size, (hidden_size, hidden_size), (1, hidden_size))
    w3, b3 = linear(ks[4], ks[5], hidden_size, (1, hidden_size), (1, 1))
    return (w1, b1, w2, b2, w3, b3)


if __name__ == "__main__":
    key = jax.random.PRNGKey(0)
    k_param, k_x, k_y, k_x2, k_y2 = jax.random.split(key, 5)

    INPUT_SIZE, HIDDEN = 38, 64
    params_f32 = init_params(k_param, INPUT_SIZE, HIDDEN)
    params = prepare_params(params_f32)   # one-time bf16 cast of W1/W2

    def reference(x, label):
        w1, b1, w2, b2, w3, b3 = params_f32
        h = jnp.maximum(jnp.dot(x.astype(jnp.bfloat16), w1.astype(jnp.bfloat16),
                                preferred_element_type=jnp.float32) + b1, 0.0)
        h = jnp.maximum(jnp.dot(h.astype(jnp.bfloat16), w2.astype(jnp.bfloat16),
                                preferred_element_type=jnp.float32) + b2, 0.0)
        logits = (h @ w3.T + b3).reshape(-1)
        probs = jax.nn.sigmoid(logits)
        sp = jnp.maximum(logits, 0.0) + jnp.log1p(jnp.exp(-jnp.abs(logits)))
        loss = jnp.mean(sp - label * logits)
        return probs, loss

    # Small batch: single full-array tile, one grid step.
    B = 8
    x = jax.random.normal(k_x, (B, INPUT_SIZE), jnp.float32)
    label = (jax.random.uniform(k_y, (B,)) > 0.5).astype(jnp.float32)
    probs, loss = logreg_forward(x, params, label=label)
    jax.block_until_ready((probs, loss))
    ref_probs, ref_loss = reference(x, label)
    assert jnp.allclose(probs, ref_probs, atol=5e-3, rtol=5e-3), "probs mismatch (B=8)"
    assert jnp.allclose(loss, ref_loss, atol=5e-3, rtol=5e-3), "loss mismatch (B=8)"

    # Inference path (no label, no-loss kernel variant).
    probs_nl, loss_nl = logreg_forward(x, params, label=None)
    jax.block_until_ready(probs_nl)
    assert loss_nl is None
    assert jnp.allclose(probs_nl, ref_probs, atol=5e-3, rtol=5e-3), "probs mismatch (infer)"

    # Larger batch: exercises the 2-way parallel axis + per-core loss partials.
    B2 = 512
    x2 = jax.random.normal(k_x2, (B2, INPUT_SIZE), jnp.float32)
    label2 = (jax.random.uniform(k_y2, (B2,)) > 0.5).astype(jnp.float32)
    probs2, loss2 = logreg_forward(x2, params, label=label2)
    jax.block_until_ready((probs2, loss2))
    ref_probs2, ref_loss2 = reference(x2, label2)
    assert jnp.allclose(probs2, ref_probs2, atol=5e-3, rtol=5e-3), "probs mismatch (B=512)"
    assert jnp.allclose(loss2, ref_loss2, atol=5e-3, rtol=5e-3), "loss mismatch (B=512)"

    print("KERNEL_OK")
</pallas_src>

<mosaic_0001>
module attributes {stable_mosaic.version = 11 : i64} {
  func.func @_mlp_bce_kernel(%arg0: i32, %arg1: i32, %arg2: memref<8x38xf32, #tpu.memory_space<vmem>>, %arg3: memref<38x64xbf16, #tpu.memory_space<vmem>>, %arg4: memref<1x64xf32, #tpu.memory_space<vmem>>, %arg5: memref<64x64xbf16, #tpu.memory_space<vmem>>, %arg6: memref<1x64xf32, #tpu.memory_space<vmem>>, %arg7: memref<1x64xf32, #tpu.memory_space<vmem>>, %arg8: memref<1x1xf32, #tpu.memory_space<vmem>>, %arg9: memref<1x8xf32, #tpu.memory_space<vmem>>, %arg10: memref<1x8xf32, #tpu.memory_space<vmem>>, %arg11: memref<1x128xf32, #tpu.memory_space<vmem>>) attributes {dimension_semantics = [#tpu.dimension_semantics<parallel>, #tpu.dimension_semantics<arbitrary>], iteration_bounds = array<i64: 1, 1>, scalar_prefetch = 0 : i64, scratch_operands = 0 : i64, tpu.core_type = #tpu.core_type<tc>, window_params = [{transform_indices = @transform_0, window_bounds = array<i64: 8, 38>}, {pipeline_mode = #tpu.pipeline_mode<synchronous>, transform_indices = @transform_1, window_bounds = array<i64: 38, 64>}, {pipeline_mode = #tpu.pipeline_mode<synchronous>, transform_indices = @transform_2, window_bounds = array<i64: 1, 64>}, {pipeline_mode = #tpu.pipeline_mode<synchronous>, transform_indices = @transform_3, window_bounds = array<i64: 64, 64>}, {pipeline_mode = #tpu.pipeline_mode<synchronous>, transform_indices = @transform_4, window_bounds = array<i64: 1, 64>}, {pipeline_mode = #tpu.pipeline_mode<synchronous>, transform_indices = @transform_5, window_bounds = array<i64: 1, 64>}, {pipeline_mode = #tpu.pipeline_mode<synchronous>, transform_indices = @transform_6, window_bounds = array<i64: 1, 1>}, {transform_indices = @transform_7, window_bounds = array<i64: 1, 8>}, {transform_indices = @transform_8, window_bounds = array<i64: 1, 8>}, {transform_indices = @transform_9, window_bounds = array<i64: 1, 128>}]} {
    %c0_i32 = arith.constant 0 : i32
    %0 = arith.cmpi eq, %arg1, %c0_i32 : i32
    %1 = arith.extui %0 : i1 to i32
    %c0_i32_0 = arith.constant 0 : i32
    %2 = arith.cmpi ne, %1, %c0_i32_0 : i32
    scf.if %2 {
      %cst_34 = arith.constant 0.000000e+00 : f32
      %64 = vector.broadcast %cst_34 : f32 to vector<1x128xf32>
      %c0_35 = arith.constant 0 : index
      %c0_36 = arith.constant 0 : index
      %65 = vector.load %arg11[%c0_35, %c0_36] : memref<1x128xf32, #tpu.memory_space<vmem>>, vector<1x128xf32>
      tpu.vector_store %arg11[%c0_35, %c0_36], %64 {strides = array<i32>} : memref<1x128xf32, #tpu.memory_space<vmem>>, vector<1x128xf32>,
    } else {
    }
    %c0 = arith.constant 0 : index
    %c0_1 = arith.constant 0 : index
    %3 = vector.load %arg2[%c0, %c0_1] : memref<8x38xf32, #tpu.memory_space<vmem>>, vector<8x38xf32>
    %4 = arith.truncf %3 : vector<8x38xf32> to vector<8x38xbf16>
    %c0_2 = arith.constant 0 : index
    %c0_3 = arith.constant 0 : index
    %5 = vector.load %arg3[%c0_2, %c0_3] : memref<38x64xbf16, #tpu.memory_space<vmem>>, vector<38x64xbf16>
    %cst = arith.constant dense<0.000000e+00> : vector<8x64xf32>
    %6 = tpu.matmul %4, %5, %cst {dimension_numbers = #tpu.dot_dimension_numbers<[1], [0], [0], [1], [0, 0, 1, 1], [], []>} : vector<8x38xbf16>, vector<38x64xbf16>, vector<8x64xf32> -> vector<8x64xf32>
    %c0_4 = arith.constant 0 : index
    %c0_5 = arith.constant 0 : index
    %7 = vector.load %arg4[%c0_4, %c0_5] : memref<1x64xf32, #tpu.memory_space<vmem>>, vector<1x64xf32>
    %8 = vector.broadcast %7 : vector<1x64xf32> to vector<8x64xf32>
    %9 = arith.addf %6, %8 : vector<8x64xf32>
    %cst_6 = arith.constant 0.000000e+00 : f32
    %10 = vector.broadcast %cst_6 : f32 to vector<8x64xf32>
    %11 = arith.maximumf %9, %10 : vector<8x64xf32>
    %12 = arith.truncf %11 : vector<8x64xf32> to vector<8x64xbf16>
    %c0_7 = arith.constant 0 : index
    %c0_8 = arith.constant 0 : index
    %13 = vector.load %arg5[%c0_7, %c0_8] : memref<64x64xbf16, #tpu.memory_space<vmem>>, vector<64x64xbf16>
    %cst_9 = arith.constant dense<0.000000e+00> : vector<8x64xf32>
    %14 = tpu.matmul %12, %13, %cst_9 {dimension_numbers = #tpu.dot_dimension_numbers<[1], [0], [0], [1], [0, 0, 1, 1], [], []>} : vector<8x64xbf16>, vector<64x64xbf16>, vector<8x64xf32> -> vector<8x64xf32>
    %c0_10 = arith.constant 0 : index
    %c0_11 = arith.constant 0 : index
    %15 = vector.load %arg6[%c0_10, %c0_11] : memref<1x64xf32, #tpu.memory_space<vmem>>, vector<1x64xf32>
    %16 = vector.broadcast %15 : vector<1x64xf32> to vector<8x64xf32>
    %17 = arith.addf %14, %16 : vector<8x64xf32>
    %cst_12 = arith.constant 0.000000e+00 : f32
    %18 = vector.broadcast %cst_12 : f32 to vector<8x64xf32>
    %19 = arith.maximumf %17, %18 : vector<8x64xf32>
    %c0_13 = arith.constant 0 : index
    %c0_14 = arith.constant 0 : index
    %20 = vector.load %arg7[%c0_13, %c0_14] : memref<1x64xf32, #tpu.memory_space<vmem>>, vector<1x64xf32>
    %cst_15 = arith.constant dense<0.000000e+00> : vector<1x8xf32>
    %21 = tpu.matmul %20, %19, %cst_15 {dimension_numbers = #tpu.dot_dimension_numbers<[1], [1], [0], [0], [0, 0, 1, 0], [], []>} : vector<1x64xf32>, vector<8x64xf32>, vector<1x8xf32> -> vector<1x8xf32>
    %c0_16 = arith.constant 0 : index
    %c0_17 = arith.constant 0 : index
    %22 = vector.load %arg8[%c0_16, %c0_17] : memref<1x1xf32, #tpu.memory_space<vmem>>, vector<1x1xf32>
    %23 = vector.broadcast %22 : vector<1x1xf32> to vector<1x8xf32>
    %24 = arith.addf %21, %23 : vector<1x8xf32>
    %25 = math.absf %24 : vector<1x8xf32>
    %cst_18 = arith.constant 0.000000e+00 : f32
    %26 = vector.broadcast %cst_18 : f32 to vector<1x8xf32>
    %27 = arith.subf %26, %25 : vector<1x8xf32>
    %28 = math.exp %27 : vector<1x8xf32>
    %cst_19 = arith.constant 1.000000e+00 : f32
    %29 = vector.broadcast %cst_19 : f32 to vector<1x8xf32>
    %30 = arith.addf %29, %28 : vector<1x8xf32>
    %31 = tpu.reciprocal %30 {approx = true} : vector<1x8xf32> -> vector<1x8xf32>
    %cst_20 = arith.constant 0.000000e+00 : f32
    %32 = vector.broadcast %cst_20 : f32 to vector<1x8xf32>
    %33 = arith.cmpf oge, %24, %32 : vector<1x8xf32>
    %34 = arith.mulf %28, %31 : vector<1x8xf32>
    %35 = arith.select %33, %31, %34 : vector<1x8xi1>, vector<1x8xf32>
    %c0_21 = arith.constant 0 : index
    %c0_22 = arith.constant 0 : index
    %36 = vector.load %arg10[%c0_21, %c0_22] : memref<1x8xf32, #tpu.memory_space<vmem>>, vector<1x8xf32>
    tpu.vector_store %arg10[%c0_21, %c0_22], %35 {strides = array<i32>} : memref<1x8xf32, #tpu.memory_space<vmem>>, vector<1x8xf32>,
    %cst_23 = arith.constant 0.000000e+00 : f32
    %37 = vector.broadcast %cst_23 : f32 to vector<1x8xf32>
    %38 = arith.maximumf %24, %37 : vector<1x8xf32>
    %cst_24 = arith.constant 1.000000e+00 : f32
    %39 = vector.broadcast %cst_24 : f32 to vector<1x8xf32>
    %40 = arith.addf %39, %28 : vector<1x8xf32>
    %41 = math.log %40 : vector<1x8xf32>
    %42 = arith.addf %38, %41 : vector<1x8xf32>
    %c0_25 = arith.constant 0 : index
    %c0_26 = arith.constant 0 : index
    %43 = vector.load %arg9[%c0_25, %c0_26] : memref<1x8xf32, #tpu.memory_space<vmem>>, vector<1x8xf32>
    %44 = arith.mulf %43, %24 : vector<1x8xf32>
    %45 = arith.subf %42, %44 : vector<1x8xf32>
    %c1_i32 = arith.constant 1 : i32
    %46 = arith.muli %arg0, %c1_i32 : i32
    %47 = arith.addi %46, %arg1 : i32
    %c8_i32 = arith.constant 8 : i32
    %48 = arith.muli %47, %c8_i32 : i32
    %49 = tpu.iota {dimensions = array<i32: 1>} : vector<1x8xi32>
    %50 = vector.broadcast %48 : i32 to vector<1x8xi32>
    %51 = arith.addi %50, %49 : vector<1x8xi32>
    %c8_i32_27 = arith.constant 8 : i32
    %52 = vector.broadcast %c8_i32_27 : i32 to vector<1x8xi32>
    %53 = arith.cmpi slt, %51, %52 : vector<1x8xi32>
    %cst_28 = arith.constant 0.000000e+00 : f32
    %54 = vector.broadcast %cst_28 : f32 to vector<1x8xf32>
    %55 = arith.select %53, %45, %54 : vector<1x8xi1>, vector<1x8xf32>
    %c0_29 = arith.constant 0 : index
    %c0_30 = arith.constant 0 : index
    %56 = vector.load %arg11[%c0_29, %c0_30] : memref<1x128xf32, #tpu.memory_space<vmem>>, vector<1x128xf32>
    %57 = vector.shape_cast %55 : vector<1x8xf32> to vector<1x1x8xf32>
    %cst_31 = arith.constant dense<0.000000e+00> : vector<1xf32>
    %58 = vector.multi_reduction <add>, %57, %cst_31 [1, 2] : vector<1x1x8xf32> to vector<1xf32>
    %59 = vector.shape_cast %58 : vector<1xf32> to vector<1x1x1xf32>
    %60 = vector.extract %59[0, 0, 0] : f32 from vector<1x1x1xf32>
    %61 = vector.broadcast %60 : f32 to vector<1x128xf32>
    %62 = arith.addf %56, %61 : vector<1x128xf32>
    %c0_32 = arith.constant 0 : index
    %c0_33 = arith.constant 0 : index
    %63 = vector.load %arg11[%c0_32, %c0_33] : memref<1x128xf32, #tpu.memory_space<vmem>>, vector<1x128xf32>
    tpu.vector_store %arg11[%c0_32, %c0_33], %62 {strides = array<i32>} : memref<1x128xf32, #tpu.memory_space<vmem>>, vector<1x128xf32>,
    return
  }
  func.func @transform_0(%arg0: i32, %arg1: i32) -> (i32, i32) {
    %c1_i32 = arith.constant 1 : i32
    %0 = arith.muli %arg0, %c1_i32 : i32
    %1 = arith.addi %0, %arg1 : i32
    %c0_i32 = arith.constant 0 : i32
    %c0_i32_0 = arith.constant 0 : i32
    return %1, %c0_i32 : i32, i32
  }
  func.func @transform_1(%arg0: i32, %arg1: i32) -> (i32, i32) {
    %c0_i32 = arith.constant 0 : i32
    %c0_i32_0 = arith.constant 0 : i32
    %c0_i32_1 = arith.constant 0 : i32
    return %c0_i32, %c0_i32_0 : i32, i32
  }
  func.func @transform_2(%arg0: i32, %arg1: i32) -> (i32, i32) {
    %c0_i32 = arith.constant 0 : i32
    %c0_i32_0 = arith.constant 0 : i32
    %c0_i32_1 = arith.constant 0 : i32
    return %c0_i32, %c0_i32_0 : i32, i32
  }
  func.func @transform_3(%arg0: i32, %arg1: i32) -> (i32, i32) {
    %c0_i32 = arith.constant 0 : i32
    %c0_i32_0 = arith.constant 0 : i32
    %c0_i32_1 = arith.constant 0 : i32
    return %c0_i32, %c0_i32_0 : i32, i32
  }
  func.func @transform_4(%arg0: i32, %arg1: i32) -> (i32, i32) {
    %c0_i32 = arith.constant 0 : i32
    %c0_i32_0 = arith.constant 0 : i32
    %c0_i32_1 = arith.constant 0 : i32
    return %c0_i32, %c0_i32_0 : i32, i32
  }
  func.func @transform_5(%arg0: i32, %arg1: i32) -> (i32, i32) {
    %c0_i32 = arith.constant 0 : i32
    %c0_i32_0 = arith.constant 0 : i32
    %c0_i32_1 = arith.constant 0 : i32
    return %c0_i32, %c0_i32_0 : i32, i32
  }
  func.func @transform_6(%arg0: i32, %arg1: i32) -> (i32, i32) {
    %c0_i32 = arith.constant 0 : i32
    %c0_i32_0 = arith.constant 0 : i32
    %c0_i32_1 = arith.constant 0 : i32
    return %c0_i32, %c0_i32_0 : i32, i32
  }
  func.func @transform_7(%arg0: i32, %arg1: i32) -> (i32, i32) {
    %c1_i32 = arith.constant 1 : i32
    %0 = arith.muli %arg0, %c1_i32 : i32
    %1 = arith.addi %0, %arg1 : i32
    %c0_i32 = arith.constant 0 : i32
    %c0_i32_0 = arith.constant 0 : i32
    return %c0_i32, %1 : i32, i32
  }
  func.func @transform_8(%arg0: i32, %arg1: i32) -> (i32, i32) {
    %c1_i32 = arith.constant 1 : i32
    %0 = arith.muli %arg0, %c1_i32 : i32
    %1 = arith.addi %0, %arg1 : i32
    %c0_i32 = arith.constant 0 : i32
    %c0_i32_0 = arith.constant 0 : i32
    return %c0_i32, %1 : i32, i32
  }
  func.func @transform_9(%arg0: i32, %arg1: i32) -> (i32, i32) {
    %c0_i32 = arith.constant 0 : i32
    %c0_i32_0 = arith.constant 0 : i32
    return %c0_i32, %arg0 : i32, i32
  }
}

</mosaic_0001>

<llo_original>
// kernel: tpu_custom_call.1
$region0: #{tpu_custom_call.1}
  #allocation0 [shape = 'u32[]', space=smem, size = 0x4, offset = 0x4, fixed_abs, tag = 'smem constant byte address 0x4 - core index']
  #allocation1 [shape = 'u32[144,128]{1,0:T(1,128)}', space=vmem, size = 0x12000, scoped, tag = 'internal scratch']
  #allocation2 [shape = 'f32[1,1]{1,0:T(1,128)S(1)}', space=vmem, size = 0x200, scoped, tag = 'scoped memory for tpu_custom_call.1']
  %s0 = inlined_call_operand.hbm [shape: f32[8,38], index: 0, kind: input, shape index: {}]
  %s1 = inlined_call_operand.hbm [shape: bf16[38,64], index: 1, kind: input, shape index: {}]
  %s2 = inlined_call_operand.vmem [shape: f32[1,64], index: 2, kind: input, shape index: {}]
  %s3 = inlined_call_operand.hbm [shape: bf16[64,64], index: 3, kind: input, shape index: {}]
  %s4 = inlined_call_operand.vmem [shape: f32[1,64], index: 4, kind: input, shape index: {}]
  %s5 = inlined_call_operand.vmem [shape: f32[1,64], index: 5, kind: input, shape index: {}]
  %s6 = inlined_call_operand.<no memory space> [shape: f32[1,1], index: 6, kind: input, shape index: {}]
  %s7 = inlined_call_operand.vmem [shape: f32[1,8], index: 7, kind: input, shape index: {}]
  %s8 = inlined_call_operand.hbm [shape: f32[1,8], index: 8, kind: output, shape index: {0}]
  %s9 = inlined_call_operand.hbm [shape: f32[1,128], index: 9, kind: output, shape index: {1}]
  %10 = xla_tuple %s8, %s9
  %s11 = sld [smem:[#allocation0]]
  $region66: #{tpu_custom_call.1} parent=0
    _
  %s13 = ssub.s32 1, %s11
  %s14 = scalar_select 0, %s13, %s11
  %v15 = vstv %s6
  %16 = vst [vmem:[#allocation2] sm:$0x1] %v15
  $region1: #{tpu_custom_call.1} parent=0
    #allocation3 [shape = 'u8[4096]{0}', space=vmem, size = 0x1000, scoped, tag = 'input window, operand 0, single buffered']
    #allocation4 [shape = 's32[1]{0}', space=sflag, size = 0x4, scoped, tag = 'scoped memory for tpu_custom_call.1']
    #allocation5 [shape = 's32[1]{0}', space=sflag, size = 0x4, scoped, tag = 'scoped memory for tpu_custom_call.1']
    #allocation6 [shape = 'u8[10240]{0}', space=vmem, size = 0x2800, scoped, tag = 'input window, operand 1, single buffered']
    #allocation7 [shape = 's32[1]{0}', space=sflag, size = 0x4, scoped, tag = 'scoped memory for tpu_custom_call.1']
    #allocation8 [shape = 'u8[16384]{0}', space=vmem, size = 0x4000, scoped, tag = 'input window, operand 3, single buffered']
    #allocation9 [shape = 'u8[512]{0}', space=vmem, size = 0x400, scoped, tag = 'output window, operand 0, single buffered']
    #allocation10 [shape = 'u8[512]{0}', space=vmem, size = 0x400, scoped, tag = 'output window, operand 1, single buffered']
    #allocation11 [shape = 's32[1]{0}', space=sflag, size = 0x4, scoped, tag = 'scoped memory for tpu_custom_call.1']
    %17 = vsyncpa [#allocation4], 0
    %18 = vsyncpa [#allocation7], 0
    %19 = vsyncpa [#allocation5], 0
    %20 = vsyncpa [#allocation11], 0
    // Predicated region
    $region2: #{tpu_custom_call.1} parent=1 // pred_check
      _
    $region3: #{tpu_custom_call.1} parent=1 // pred_check_branch
      %22 = sbr.rel (0) target = $region5
    $region4: #{tpu_custom_call.1} parent=1 // pred_region
      %s23 = sadd.s32 0, 0
      %s25 = ssub.s32 128, 128
      %26 = vsyncadd [#allocation4], %s25
      %s27 = smul.addr %s23, 128
      %s28 = scalar_lea.hbm %s0, %s27
      %s30 = sshll.u32 [#allocation3], 4
      %s31 = int_to_ptr.vmem [resolvable:$true] %s30
      %33 = dma.hbm_to_vmem [thread:$0]  %s28, 128, %s31, [#allocation4]
    $region5: #{tpu_custom_call.1} parent=1 // pred_fallthru
      _
    // Predicated region
    $region6: #{tpu_custom_call.1} parent=1 // pred_check
      _
    $region7: #{tpu_custom_call.1} parent=1 // pred_check_branch
      %35 = sbr.rel (0) target = $region9
    $region8: #{tpu_custom_call.1} parent=1 // pred_region
      %s37 = ssub.s32 320, 320
      %38 = vsyncadd [#allocation7], %s37
      %s39 = sshll.u32 [#allocation6], 4
      %s40 = int_to_ptr.vmem [resolvable:$true] %s39
      %45 = dma.hbm_to_vmem [thread:$0]  %s1, 320, %s40, [#allocation7], 64, 64, 4
    $region9: #{tpu_custom_call.1} parent=1 // pred_fallthru
      _
    // Predicated region
    $region10: #{tpu_custom_call.1} parent=1 // pred_check
      _
    $region11: #{tpu_custom_call.1} parent=1 // pred_check_branch
      %47 = sbr.rel (0) target = $region13
    $region12: #{tpu_custom_call.1} parent=1 // pred_region
      _
    $region13: #{tpu_custom_call.1} parent=1 // pred_fallthru
      _
    // Predicated region
    $region14: #{tpu_custom_call.1} parent=1 // pred_check
      _
    $region15: #{tpu_custom_call.1} parent=1 // pred_check_branch
      %49 = sbr.rel (0) target = $region17
    $region16: #{tpu_custom_call.1} parent=1 // pred_region
      %s51 = ssub.s32 512, 512
      %52 = vsyncadd [#allocation7], %s51
      %s53 = sshll.u32 [#allocation8], 4
      %s54 = int_to_ptr.vmem [resolvable:$true] %s53
      %59 = dma.hbm_to_vmem [thread:$0]  %s3, 512, %s54, [#allocation7], 64, 64, 4
    $region17: #{tpu_custom_call.1} parent=1 // pred_fallthru
      _
    // Predicated region
    $region18: #{tpu_custom_call.1} parent=1 // pred_check
      _
    $region19: #{tpu_custom_call.1} parent=1 // pred_check_branch
      %61 = sbr.rel (0) target = $region21
    $region20: #{tpu_custom_call.1} parent=1 // pred_region
      _
    $region21: #{tpu_custom_call.1} parent=1 // pred_fallthru
      _
    // Predicated region
    $region22: #{tpu_custom_call.1} parent=1 // pred_check
      _
    $region23: #{tpu_custom_call.1} parent=1 // pred_check_branch
      %63 = sbr.rel (0) target = $region25
    $region24: #{tpu_custom_call.1} parent=1 // pred_region
      _
    $region25: #{tpu_custom_call.1} parent=1 // pred_fallthru
      _
    // Predicated region
    $region26: #{tpu_custom_call.1} parent=1 // pred_check
      _
    $region27: #{tpu_custom_call.1} parent=1 // pred_check_branch
      %65 = sbr.rel (0) target = $region29
    $region28: #{tpu_custom_call.1} parent=1 // pred_region
      _
    $region29: #{tpu_custom_call.1} parent=1 // pred_fallthru
      _
    // Predicated region
    $region30: #{tpu_custom_call.1} parent=1 // pred_check
      _
    $region31: #{tpu_custom_call.1} parent=1 // pred_check_branch
      %67 = sbr.rel (0) target = $region33
    $region32: #{tpu_custom_call.1} parent=1 // pred_region
      %s68 = sadd.s32 0, 0
      %p69 = scmp.lt.s32.totalorder %s68, 0
      %s70 = scalar_select %p69, %s68, 0
      %s71 = scalar_lea.vmem %s7, %s70
      %s72 = sadd.s32 0, 0
    $region33: #{tpu_custom_call.1} parent=1 // pred_fallthru
      _
    // Predicated region
    $region34: #{tpu_custom_call.1} parent=1 // pred_check
      _
    $region35: #{tpu_custom_call.1} parent=1 // pred_check_branch
      %74 = sbr.rel (0) target = $region37
    $region36: #{tpu_custom_call.1} parent=1 // pred_region
      %75 = dma.done [#allocation4], 128
    $region37: #{tpu_custom_call.1} parent=1 // pred_fallthru
      _
    // Predicated region
    $region38: #{tpu_custom_call.1} parent=1 // pred_check
      _
    $region39: #{tpu_custom_call.1} parent=1 // pred_check_branch
      %77 = sbr.rel (0) target = $region41
    $region40: #{tpu_custom_call.1} parent=1 // pred_region
      %78 = dma.done [#allocation7], 320
    $region41: #{tpu_custom_call.1} parent=1 // pred_fallthru
      _
    // Predicated region
    $region42: #{tpu_custom_call.1} parent=1 // pred_check
      _
    $region43: #{tpu_custom_call.1} parent=1 // pred_check_branch
      %80 = sbr.rel (0) target = $region45
    $region44: #{tpu_custom_call.1} parent=1 // pred_region
      %81 = dma.done [#allocation7], 512
    $region45: #{tpu_custom_call.1} parent=1 // pred_fallthru
      _
    %s82 = sadd.s32 0, 0
    %p83 = scmp.lt.s32.totalorder %s82, 0
    %s84 = scalar_select %p83, %s82, 0
    %s85 = scalar_lea.vmem %s7, %s84
    %s86 = sadd.s32 0, 0
    %s87 = sadd.s32 0, 0
    %p88 = scmp.lt.s32.totalorder %s87, 0
    %s89 = scalar_select %p88, %s87, 0
    %s90 = scalar_lea.vmem %s7, %s89
    %s91 = sadd.s32 0, 0
    %s92 = sadd.s32 0, 0
    %p94 = scmp.eq.s32.totalorder 0, 0
    // Predicated region
    $region46: #{tpu_custom_call.1} parent=1 // pred_check
      %p95 = pneg %p94
    $region47: #{tpu_custom_call.1} parent=1 // pred_check_branch
      %97 = sbr.rel (%p95) target = $region49
    $region48: #{tpu_custom_call.1} parent=1 // pred_region
      %98 = vst [vmem:[#allocation10] sm:$0x1] 0.0
    $region49: #{tpu_custom_call.1} parent=1 // pred_fallthru
      _
    %v99 = vld [vmem:[#allocation3] sm:$0xff]
    %v100 = vpack.c.bf16 %v99, %v99
    %v101 = vld [vmem:[#allocation6] sm:$0xf]
    %v102 = vld [vmem:[#allocation6 + $0x4] sm:$0xf]
    %v103 = vld [vmem:[#allocation6 + $0x8] sm:$0xf]
    %v104 = vld [vmem:[#allocation6 + $0xc] sm:$0xf]
    %v105 = vld [vmem:[#allocation6 + $0x10] sm:$0x7]
    %v106 = vld [vmem:[%s2] sm:$0x1]
    %v108 = vlaneseq
    %v109 = vshrl.u32 %v108, 7
    %v110 = vsub.s32 0, %v109
    %v111 = vrot.slane %v106, %v110
    %v118 = vunpack.c.l.b16 %v101
    %v119 = vunpack.c.l.b16 %v102
    %v120 = vunpack.c.l.b16 %v103
    %v121 = vunpack.c.l.b16 %v104
    %v122 = vunpack.c.l.b16 %v105
    %v123 = vpack.c.b16 %v119, %v118
    %v124 = vpack.c.b16 %v121, %v120
    %v125 = vpack.c.b16 %v122, %v122
    %vm128 = vcmask 310272
    %v130 = vsel %vm128, %v100, 0
    %vm132 = vcmask 1042432
    %v134 = vsel %vm132, %v125, 0
    %136 = vmatprep.subr.bf16.mxu0 0
    %137 = vmatpush1.bf16.msra.mxu0 0
    %138 = vmatprep.subr.bf16.mxu0 0
    %139 = vmatpush1.bf16.msra.mxu0 0
    %140 = vmatprep.subr.bf16.mxu0 0
    %141 = vmatpush1.bf16.msra.mxu0 0
    %142 = vmatprep.subr.bf16.mxu0 0
    %143 = vmatpush1.bf16.msra.mxu0 0
    %144 = vmatprep.subr.bf16.mxu0 0
    %145 = vmatpush1.bf16.msra.mxu0 0
    %146 = vmatprep.subr.bf16.mxu0 0
    %147 = vmatpush1.bf16.msra.mxu0 %v134
    %148 = vmatprep.subr.bf16.mxu0 0
    %149 = vmatpush1.bf16.msra.mxu0 %v124
    %150 = vmatprep.subr.bf16.mxu0 0
    %151 = vmatpush1.bf16.msra.mxu0 %v123
    %152 = vmatprep.subr.bf16.mxu0 0
    %153 = vmatpush2.bf16.msra.mxu0 0
    %154 = vmatprep.subr.bf16.mxu0 0
    %155 = vmatpush2.bf16.msra.mxu0 0
    %156 = vmatprep.subr.bf16.mxu0 0
    %157 = vmatpush2.bf16.msra.mxu0 0
    %158 = vmatprep.subr.bf16.mxu0 0
    %159 = vmatpush2.bf16.msra.mxu0 0
    %160 = vmatprep.subr.bf16.mxu0 0
    %161 = vmatpush2.bf16.msra.mxu0 0
    %162 = vmatprep.subr.bf16.mxu0 0
    %163 = vmatpush2.bf16.msra.mxu0 0
    %164 = vmatprep.subr.bf16.mxu0 0
    %165 = vmatpush2.bf16.msra.mxu0 0
    %166 = vmatprep.subr.bf16.mxu0 0
    %167 = vmatpush2.bf16.msra.mxu0 0
    %168 = vmatprep.mubr.bf16.mxu0 0
    %169 = vmatmul.mubr.bf16.gmra.mxu0 %v130
    %v170 = vpop.f32.mrf.mxu0
    %v171 = vadd.f32 %v111, %v170
    %v172 = vpop.f32.mrf.mxu0
    %v173 = vpop.f32.mrf.mxu0
    %v174 = vpop.f32.mrf.mxu0
    %175 = vdwg.mxu0
    %v176 = vmax.f32 %v171, 0.0
    %v177 = vpack.c.bf16 %v176, %v176
    %v178 = vld [vmem:[#allocation8] sm:$0xf]
    %v179 = vld [vmem:[#allocation8 + $0x4] sm:$0xf]
    %v180 = vld [vmem:[#allocation8 + $0x8] sm:$0xf]
    %v181 = vld [vmem:[#allocation8 + $0xc] sm:$0xf]
    %v182 = vld [vmem:[#allocation8 + $0x10] sm:$0xf]
    %v183 = vld [vmem:[#allocation8 + $0x14] sm:$0xf]
    %v184 = vld [vmem:[#allocation8 + $0x18] sm:$0xf]
    %v185 = vld [vmem:[#allocation8 + $0x1c] sm:$0xf]
    %v186 = vld [vmem:[%s4] sm:$0x1]
    %v188 = vlaneseq
    %v189 = vshrl.u32 %v188, 7
    %v190 = vsub.s32 0, %v189
    %v191 = vrot.slane %v186, %v190
    %v201 = vunpack.c.l.b16 %v178
    %v202 = vunpack.c.l.b16 %v179
    %v203 = vunpack.c.l.b16 %v180
    %v204 = vunpack.c.l.b16 %v181
    %v205 = vunpack.c.l.b16 %v182
    %v206 = vunpack.c.l.b16 %v183
    %v207 = vunpack.c.l.b16 %v184
    %v208 = vunpack.c.l.b16 %v185
    %v209 = vpack.c.b16 %v202, %v201
    %v210 = vpack.c.b16 %v204, %v203
    %v211 = vpack.c.b16 %v206, %v205
    %v212 = vpack.c.b16 %v208, %v207
    %vm217 = vcmask 523264
    %v219 = vsel %vm217, %v177, 0
    %221 = vmatprep.subr.bf16.mxu0 0
    %222 = vmatpush1.bf16.msra.mxu0 0
    %223 = vmatprep.subr.bf16.mxu0 0
    %224 = vmatpush1.bf16.msra.mxu0 0
    %225 = vmatprep.subr.bf16.mxu0 0
    %226 = vmatpush1.bf16.msra.mxu0 0
    %227 = vmatprep.subr.bf16.mxu0 0
    %228 = vmatpush1.bf16.msra.mxu0 0
    %229 = vmatprep.subr.bf16.mxu0 0
    %230 = vmatpush1.bf16.msra.mxu0 %v212
    %231 = vmatprep.subr.bf16.mxu0 0
    %232 = vmatpush1.bf16.msra.mxu0 %v211
    %233 = vmatprep.subr.bf16.mxu0 0
    %234 = vmatpush1.bf16.msra.mxu0 %v210
    %235 = vmatprep.subr.bf16.mxu0 0
    %236 = vmatpush1.bf16.msra.mxu0 %v209
    %237 = vmatprep.subr.bf16.mxu0 0
    %238 = vmatpush2.bf16.msra.mxu0 0
    %239 = vmatprep.subr.bf16.mxu0 0
    %240 = vmatpush2.bf16.msra.mxu0 0
    %241 = vmatprep.subr.bf16.mxu0 0
    %242 = vmatpush2.bf16.msra.mxu0 0
    %243 = vmatprep.subr.bf16.mxu0 0
    %244 = vmatpush2.bf16.msra.mxu0 0
    %245 = vmatprep.subr.bf16.mxu0 0
    %246 = vmatpush2.bf16.msra.mxu0 0
    %247 = vmatprep.subr.bf16.mxu0 0
    %248 = vmatpush2.bf16.msra.mxu0 0
    %249 = vmatprep.subr.bf16.mxu0 0
    %250 = vmatpush2.bf16.msra.mxu0 0
    %251 = vmatprep.subr.bf16.mxu0 0
    %252 = vmatpush2.bf16.msra.mxu0 0
    %253 = vmatprep.mubr.bf16.mxu0 0
    %254 = vmatmul.mubr.bf16.gmra.mxu0 %v219
    %v255 = vpop.f32.mrf.mxu0
    %v256 = vadd.f32 %v191, %v255
    %v257 = vpop.f32.mrf.mxu0
    %v258 = vpop.f32.mrf.mxu0
    %v259 = vpop.f32.mrf.mxu0
    %260 = vdwg.mxu0
    %v261 = vmax.f32 %v256, 0.0
    %v262 = vld [vmem:[%s5] sm:$0x1]
    %v263 = vld [vmem:[#allocation2] sm:$0x1]
    %265 = vset.pattern.permute.xlu0 0
    %266 = vperm.xlu0 %265, %v263
    %v267 = vpop.permute.xlu0 %266
    %v269 = vlaneseq
    %v270 = vshrl.u32 %v269, 7
    %v271 = vsub.s32 0, %v270
    %v272 = vrot.slane %v267, %v271
    %v274 = vsel %vm217, %v262, 0
    %v277 = vsel %vm217, %v261, 0
    %279 = vmatprep.subr.mxu0 0.0
    %280 = vmatpush1.xpose.msra.mxu0 0.0
    %281 = vmatprep.subr.mxu0 0.0
    %282 = vmatpush1.xpose.msra.mxu0 0.0
    %283 = vmatprep.subr.mxu0 0.0
    %284 = vmatpush1.xpose.msra.mxu0 0.0
    %285 = vmatprep.subr.mxu0 0.0
    %286 = vmatpush1.xpose.msra.mxu0 0.0
    %287 = vmatprep.subr.mxu0 0.0
    %288 = vmatpush1.xpose.msra.mxu0 0.0
    %289 = vmatprep.subr.mxu0 0.0
    %290 = vmatpush1.xpose.msra.mxu0 0.0
    %291 = vmatprep.subr.mxu0 0.0
    %292 = vmatpush1.xpose.msra.mxu0 0.0
    %293 = vmatprep.subr.mxu0 0.0
    %294 = vmatpush1.xpose.msra.mxu0 0.0
    %295 = vmatprep.subr.mxu0 0.0
    %296 = vmatpush1.xpose.msra.mxu0 0.0
    %297 = vmatprep.subr.mxu0 0.0
    %298 = vmatpush1.xpose.msra.mxu0 0.0
    %299 = vmatprep.subr.mxu0 0.0
    %300 = vmatpush1.xpose.msra.mxu0 0.0
    %301 = vmatprep.subr.mxu0 0.0
    %302 = vmatpush1.xpose.msra.mxu0 0.0
    %303 = vmatprep.subr.mxu0 0.0
    %304 = vmatpush1.xpose.msra.mxu0 0.0
    %305 = vmatprep.subr.mxu0 0.0
    %306 = vmatpush1.xpose.msra.mxu0 0.0
    %307 = vmatprep.subr.mxu0 0.0
    %308 = vmatpush1.xpose.msra.mxu0 0.0
    %309 = vmatprep.subr.mxu0 0.0
    %310 = vmatpush1.xpose.msra.mxu0 %v277
    %311 = vmatprep.subr.mxu0 0.0
    %312 = vmatpush2.xpose.msra.mxu0 0.0
    %313 = vmatprep.subr.mxu0 0.0
    %314 = vmatpush2.xpose.msra.mxu0 0.0
    %315 = vmatprep.subr.mxu0 0.0
    %316 = vmatpush2.xpose.msra.mxu0 0.0
    %317 = vmatprep.subr.mxu0 0.0
    %318 = vmatpush2.xpose.msra.mxu0 0.0
    %319 = vmatprep.subr.mxu0 0.0
    %320 = vmatpush2.xpose.msra.mxu0 0.0
    %321 = vmatprep.subr.mxu0 0.0
    %322 = vmatpush2.xpose.msra.mxu0 0.0
    %323 = vmatprep.subr.mxu0 0.0
    %324 = vmatpush2.xpose.msra.mxu0 0.0
    %325 = vmatprep.subr.mxu0 0.0
    %326 = vmatpush2.xpose.msra.mxu0 0.0
    %327 = vmatprep.subr.mxu0 0.0
    %328 = vmatpush2.xpose.msra.mxu0 0.0
    %329 = vmatprep.subr.mxu0 0.0
    %330 = vmatpush2.xpose.msra.mxu0 0.0
    %331 = vmatprep.subr.mxu0 0.0
    %332 = vmatpush2.xpose.msra.mxu0 0.0
    %333 = vmatprep.subr.mxu0 0.0
    %334 = vmatpush2.xpose.msra.mxu0 0.0
    %335 = vmatprep.subr.mxu0 0.0
    %336 = vmatpush2.xpose.msra.mxu0 0.0
    %337 = vmatprep.subr.mxu0 0.0
    %338 = vmatpush2.xpose.msra.mxu0 0.0
    %339 = vmatprep.subr.mxu0 0.0
    %340 = vmatpush2.xpose.msra.mxu0 0.0
    %341 = vmatprep.subr.mxu0 0.0
    %342 = vmatpush2.xpose.msra.mxu0 0.0
    %343 = vmatprep.mubr.f32.mxu0 0.0
    %344 = vmatmul.mubr.f32.gmra.mxu0 %v274
    %v345 = vpop.f32.mrf.mxu0
    %v346 = vadd.f32 %v272, %v345
    %v347 = vpop.f32.mrf.mxu0
    %348 = vdwg.mxu0
    %v349 = vand.u32 2147483647, %v346
    %v350 = vsub.f32 0.0, %v349
    %v351 = vmul.f32 %v350, 1.442695
    %v352 = vpow.pop %v351
    %v353 = vadd.f32 %v352, 1.0
    %v354 = vrcp.pop %v353
    %vm355 = vcmp.ge.f32.partialorder %v346, 0.0
    %v356 = vmul.f32 %v352, %v354
    %v357 = vsel %vm355, %v354, %v356
    %vm358 = vcmask 57344
    %359 = vst.msk [vmem:[#allocation9] sm:$0x1] %vm358, %v357
    %v360 = vmax.f32 %v346, 0.0
    %v361 = vlog2.pop %v353
    %v362 = vmul.f32 %v361, 0.6931472
    %v363 = vadd.f32 %v360, %v362
    %v364 = vld [vmem:[%s90] sm:$0x1]
    %v365 = vmul.f32 %v364, %v346
    %v366 = vsub.f32 %v363, %v365
    %s367 = sadd.s32 0, 0
    %s368 = smul.u32 %s367, 8
    %v369 = vlaneseq
    %v370 = vand.u32 %v369, 127
    %v371 = vstv %s368
    %v372 = vadd.s32 %v371, %v370
    %vm373 = vcmp.lt.s32.totalorder %v372, 8
    %v374 = vsel %vm373, %v366, 0.0
    %v375 = vld [vmem:[#allocation10] sm:$0x1]
    %v376 = vsel %vm358, %v374, 0.0
    %377 = vadd.xlane.f32.xlu0 %v376
    %v378 = vpop.xlane.xlu0 %377
    %v379 = vrot.slane %v378, 4
    %v380 = vadd.f32 %v378, %v379
    %v381 = vrot.slane %v380, 2
    %v382 = vadd.f32 %v380, %v381
    %v383 = vrot.slane %v382, 1
    %v384 = vadd.f32 %v382, %v383
    %s385 = vtos %v384
    %v386 = vstv %s385
    %v387 = vadd.f32 %v375, %v386
    %388 = vst [vmem:[#allocation10] sm:$0x1] %v387
    // Predicated region
    $region50: #{tpu_custom_call.1} parent=1 // pred_check
      _
    $region51: #{tpu_custom_call.1} parent=1 // pred_check_branch
      %390 = sbr.rel (0) target = $region53
    $region52: #{tpu_custom_call.1} parent=1 // pred_region
      %s391 = sadd.s32 0, 0
      %s393 = ssub.s32 16, 16
      %394 = vsyncadd [#allocation5], %s393
      %s395 = smul.addr %s391, 16
      %s396 = scalar_lea.hbm %s8, %s395
      %s398 = sshll.u32 [#allocation9], 4
      %s399 = int_to_ptr.vmem [resolvable:$true] %s398
      %401 = dma.vmem_to_hbm [thread:$0]  %s399, 16, %s396, [#allocation5]
    $region53: #{tpu_custom_call.1} parent=1 // pred_fallthru
      _
    // Predicated region
    $region54: #{tpu_custom_call.1} parent=1 // pred_check
      _
    $region55: #{tpu_custom_call.1} parent=1 // pred_check_branch
      %403 = sbr.rel (0) target = $region57
    $region56: #{tpu_custom_call.1} parent=1 // pred_region
      %s405 = ssub.s32 16, 16
      %406 = vsyncadd [#allocation11], %s405
      %s408 = sshll.u32 [#allocation10], 4
      %s409 = int_to_ptr.vmem [resolvable:$true] %s408
      %411 = dma.vmem_to_hbm [thread:$0]  %s409, 16, %s9, [#allocation11]
    $region57: #{tpu_custom_call.1} parent=1 // pred_fallthru
      _
    // Predicated region
    $region58: #{tpu_custom_call.1} parent=1 // pred_check
      _
    $region59: #{tpu_custom_call.1} parent=1 // pred_check_branch
      %413 = sbr.rel (0) target = $region61
    $region60: #{tpu_custom_call.1} parent=1 // pred_region
      %414 = dma.done [#allocation5], 16
    $region61: #{tpu_custom_call.1} parent=1 // pred_fallthru
      _
    // Predicated region
    $region62: #{tpu_custom_call.1} parent=1 // pred_check
      _
    $region63: #{tpu_custom_call.1} parent=1 // pred_check_branch
      %416 = sbr.rel (0) target = $region65
    $region64: #{tpu_custom_call.1} parent=1 // pred_region
      %417 = dma.done [#allocation11], 16
    $region65: #{tpu_custom_call.1} parent=1 // pred_fallthru
      _
    %418 = vsyncpa [#allocation4], 1
    %419 = vsyncpa [#allocation7], 1
    %420 = vsyncpa [#allocation5], 1
    %421 = vsyncpa [#allocation11], 1

</llo_original>
